<compile_context>
chip_gen: v7x
topology: tpu7x:2x2x1
jax: 0.10.0
libtpu: 0.0.40
codegen_flags: <defaults>
</compile_context>

<pallas_src>
import functools
import math

import jax
import jax.numpy as jnp
from jax.experimental import pallas as pl
from jax.experimental.pallas import tpu as pltpu

ANGLE = 0.1
S = 10.0
_EPS2 = 1e-24                 # (1e-12)**2 — torch F.normalize eps, squared
_COS_A = math.cos(ANGLE)
_SIN_A = math.sin(ANGLE)

_VMEM_BUDGET = 20 * 1024 * 1024        # conservative for v7x 32 MiB scoped
_VMEM_LIMIT = 32 * 1024 * 1024


def _logits_kernel(f_ref, w_ref, winv_ref, cos_ref, under_ref, f_scaled_ref,
                   *, c_valid, tc, mask_cols):
    """Pass 1 (MXU): cos_theta tiles + resident `under` accumulator."""
    c = pl.program_id(1)

    @pl.when(c == 0)
    def _():
        # Normalize the feature tile once per batch tile and fold the 1/S of
        # `cos_theta = (f @ w_n) / S` into the [tb, 1] row scale.
        # rsqrt * mul instead of sqrt + divide.
        f = f_ref[...].astype(jnp.float32)
        sumsq = jnp.sum(f * f, axis=1, keepdims=True)
        scale = jax.lax.rsqrt(jnp.maximum(sumsq, _EPS2)) * (1.0 / S)
        f_scaled_ref[...] = f * scale
        under_ref[...] = jnp.zeros_like(under_ref)

    # Raw W tile straight into the MXU; the column normalization is applied to
    # the small [tb, tc] result (precomputed [1, tc] inverse norms), and the
    # 1/S is already folded into f_scaled.
    cos_theta = jnp.dot(f_scaled_ref[...], w_ref[...],
                        preferred_element_type=jnp.float32) * winv_ref[...]
    cos_ref[...] = cos_theta

    # Accumulate the global denominator over class tiles; mask out padded
    # (zero) class columns so they do not contribute exp(0) = 1.
    e = jnp.exp(S * cos_theta)
    if mask_cols:
        col = c * tc + jax.lax.broadcasted_iota(jnp.int32, e.shape, 1)
        e = jnp.where(col < c_valid, e, 0.0)
    under_ref[...] += jnp.sum(e, axis=1, keepdims=True)


def _prob_kernel(cos_ref, under_ref, out_ref):
    """Pass 2 (EUP/VPU epilogue): fully parallel, memory-bound."""
    cos_t = cos_ref[...]
    # cos(acos(x) + a) = x*cos(a) - sqrt(1 - x^2)*sin(a);  |x| <= 1/S so the
    # sqrt argument stays well away from 0 and sin(theta) >= 0 holds.
    sin_t = jnp.sqrt(jnp.maximum(1.0 - cos_t * cos_t, 0.0))
    _top = jnp.exp(S * cos_t)
    top = jnp.exp(S * (cos_t * _COS_A - sin_t * _SIN_A))
    denom = under_ref[...] - _top + top
    # Denominator is well-conditioned; approx EUP reciprocal is plenty.
    out_ref[...] = top * pl.reciprocal(denom, approx=True)


def _round_up(x, m):
    return (x + m - 1) // m * m


def arcface_forward(feature, w):
    """feature: [B, F] f32, w: [F, C] f32 -> (probs [B, C], cos_theta [B, C])."""
    B, F = feature.shape
    F2, C = w.shape
    assert F == F2

    # ---- padding so every tile divides exactly (no silent truncation) ------
    B_pad = _round_up(B, 8) if B <= 512 else _round_up(B, 256)
    C_pad = _round_up(C, 128)
    if C_pad > 512:
        C_pad = _round_up(C_pad, 512)   # allow lane-dense tiles >= 512

    f_p = feature if B_pad == B else jnp.pad(feature, ((0, B_pad - B), (0, 0)))
    w_p = w if C_pad == C else jnp.pad(w, ((0, 0), (0, C_pad - C)))

    # Hoisted column inverse norms: computed exactly once, outside the kernel.
    winv = jax.lax.rsqrt(
        jnp.maximum(jnp.sum(w_p * w_p, axis=0, keepdims=True), _EPS2))

    # ---- pass-1 tile selection ----------------------------------------------
    # Single batch tile for B <= 512 so W streams from HBM exactly once.
    # (On v7x one could split nb=2 so the "parallel" axis shards across the
    #  two TensorCores; kept at nb=1 here to avoid re-streaming W on v5e/v6e.)
    tb = B_pad if B_pad <= 512 else 256
    nb = B_pad // tb

    tc = 128
    for cand in (2048, 1024, 512, 256, 128):
        if C_pad % cand:
            continue
        vmem = (2 * F * cand * 4          # W double buffer
                + 2 * tb * cand * 4       # cos_theta double buffer
                + 2 * cand * 4            # winv double buffer
                + 3 * tb * F * 4          # feature buffers + f_scaled scratch
                + 2 * tb * 4)             # under
        if vmem <= _VMEM_BUDGET:
            tc = cand
            break
    nc = C_pad // tc

    kernel1 = functools.partial(_logits_kernel, c_valid=C, tc=tc,
                                mask_cols=(C_pad != C))

    cos_theta_p, under = pl.pallas_call(
        kernel1,
        out_shape=(
            jax.ShapeDtypeStruct((B_pad, C_pad), jnp.float32),
            jax.ShapeDtypeStruct((B_pad, 1), jnp.float32),
        ),
        grid=(nb, nc),
        in_specs=[
            pl.BlockSpec((tb, F), lambda b, c: (b, 0)),
            pl.BlockSpec((F, tc), lambda b, c: (0, c)),
            pl.BlockSpec((1, tc), lambda b, c: (0, c)),
        ],
        out_specs=(
            pl.BlockSpec((tb, tc), lambda b, c: (b, c)),
            pl.BlockSpec((tb, 1), lambda b, c: (b, 0)),   # resident accumulator
        ),
        scratch_shapes=[pltpu.VMEM((tb, F), jnp.float32)],
        compiler_params=pltpu.CompilerParams(
            dimension_semantics=("parallel", "arbitrary"),
            vmem_limit_bytes=_VMEM_LIMIT),
    )(f_p, w_p, winv)

    # ---- pass-2 tile selection (decoupled, large lane-dense blocks) ---------
    tb2 = tb
    tc2 = 128
    for cand in (4096, 2048, 1024, 512, 256, 128):
        if C_pad % cand:
            continue
        vmem = 4 * tb2 * cand * 4 + 2 * tb2 * 4   # cos + probs double buffers
        if vmem <= _VMEM_BUDGET:
            tc2 = cand
            break
    nb2 = B_pad // tb2
    nc2 = C_pad // tc2

    probs_p = pl.pallas_call(
        _prob_kernel,
        out_shape=jax.ShapeDtypeStruct((B_pad, C_pad), jnp.float32),
        grid=(nb2, nc2),
        in_specs=[
            pl.BlockSpec((tb2, tc2), lambda b, c: (b, c)),
            pl.BlockSpec((tb2, 1), lambda b, c: (b, 0)),
        ],
        out_specs=pl.BlockSpec((tb2, tc2), lambda b, c: (b, c)),
        compiler_params=pltpu.CompilerParams(
            dimension_semantics=("parallel", "parallel"),
            vmem_limit_bytes=_VMEM_LIMIT),
    )(cos_theta_p, under)

    if B_pad != B or C_pad != C:
        probs = probs_p[:B, :C]
        cos_theta = cos_theta_p[:B, :C]
    else:
        probs, cos_theta = probs_p, cos_theta_p

    # TODO(synk): PyTorch returns cos_theta.detach().cpu(); host transfer has
    # no Pallas equivalent, so the device array is returned instead.
    return probs, cos_theta


def _reference(feature, w):
    eps = 1e-12
    f = feature / jnp.maximum(
        jnp.sqrt(jnp.sum(feature * feature, axis=1, keepdims=True)), eps)
    wn = w / jnp.maximum(
        jnp.sqrt(jnp.sum(w * w, axis=0, keepdims=True)), eps)
    cos_theta = jnp.matmul(f, wn) / S
    theta = jnp.arccos(cos_theta)
    _top = jnp.exp(S * jnp.cos(theta))
    top = jnp.exp(S * jnp.cos(theta + ANGLE))
    under = jnp.sum(jnp.exp(cos_theta * S), axis=1, keepdims=True)
    return top / (under - _top + top), cos_theta


if __name__ == "__main__":
    # Shapes chosen so both the padding/masking path (B=14 -> 16, C=300 -> 384)
    # and the multi-class-tile `under` accumulator (nc = 3) are exercised.
    B, F, C = 14, 32, 300
    key = jax.random.PRNGKey(0)
    k_feat, k_w = jax.random.split(key)

    feature = jax.random.normal(k_feat, (B, F), dtype=jnp.float32)
    # nn.Parameter(torch.randn(num_features, num_categories)) -> normal init
    w = jax.random.normal(k_w, (F, C), dtype=jnp.float32)

    probs, cos_theta = arcface_forward(feature, w)
    jax.block_until_ready((probs, cos_theta))

    # Sanity check vs pure-JAX reference.  probs tolerance accounts for the
    # approx EUP reciprocal; cos_theta for rsqrt / folded-scale rounding.
    ref_probs, ref_cos = _reference(feature, w)
    assert jnp.allclose(cos_theta, ref_cos, atol=1e-5, rtol=1e-5), "cos_theta mismatch"
    assert jnp.allclose(probs, ref_probs, atol=1e-5, rtol=1e-3), "probs mismatch"

    print("KERNEL_OK")
</pallas_src>

<mosaic_0001>
module attributes {stable_mosaic.version = 11 : i64} {
  func.func @_logits_kernel(%arg0: i32, %arg1: i32, %arg2: memref<16x32xf32, #tpu.memory_space<vmem>>, %arg3: memref<32x128xf32, #tpu.memory_space<vmem>>, %arg4: memref<1x128xf32, #tpu.memory_space<vmem>>, %arg5: memref<16x128xf32, #tpu.memory_space<vmem>>, %arg6: memref<16x1xf32, #tpu.memory_space<vmem>>, %arg7: memref<16x32xf32, #tpu.memory_space<vmem>>) attributes {dimension_semantics = [#tpu.dimension_semantics<parallel>, #tpu.dimension_semantics<arbitrary>], iteration_bounds = array<i64: 1, 3>, scalar_prefetch = 0 : i64, scratch_operands = 1 : i64, tpu.core_type = #tpu.core_type<tc>, window_params = [{transform_indices = @transform_0, window_bounds = array<i64: 16, 32>}, {transform_indices = @transform_1, window_bounds = array<i64: 32, 128>}, {transform_indices = @transform_2, window_bounds = array<i64: 1, 128>}, {transform_indices = @transform_3, window_bounds = array<i64: 16, 128>}, {transform_indices = @transform_4, window_bounds = array<i64: 16, 1>}]} {
    %c0_i32 = arith.constant 0 : i32
    %0 = arith.cmpi eq, %arg1, %c0_i32 : i32
    %1 = arith.extui %0 : i1 to i32
    %c0_i32_0 = arith.constant 0 : i32
    %2 = arith.cmpi ne, %1, %c0_i32_0 : i32
    scf.if %2 {
      %c0_15 = arith.constant 0 : index
      %c0_16 = arith.constant 0 : index
      %26 = vector.load %arg2[%c0_15, %c0_16] : memref<16x32xf32, #tpu.memory_space<vmem>>, vector<16x32xf32>
      %27 = arith.mulf %26, %26 : vector<16x32xf32>
      %cst_17 = arith.constant dense<0.000000e+00> : vector<16xf32>
      %28 = vector.multi_reduction <add>, %27, %cst_17 [1] : vector<16x32xf32> to vector<16xf32>
      %29 = vector.shape_cast %28 : vector<16xf32> to vector<16x1xf32>
      %cst_18 = arith.constant 1.000000e-24 : f32
      %30 = vector.broadcast %cst_18 : f32 to vector<16x1xf32>
      %31 = arith.maximumf %29, %30 : vector<16x1xf32>
      %32 = math.rsqrt %31 : vector<16x1xf32>
      %cst_19 = arith.constant 1.000000e-01 : f32
      %33 = vector.broadcast %cst_19 : f32 to vector<16x1xf32>
      %34 = arith.mulf %32, %33 : vector<16x1xf32>
      %35 = vector.broadcast %34 : vector<16x1xf32> to vector<16x32xf32>
      %36 = arith.mulf %26, %35 : vector<16x32xf32>
      %c0_20 = arith.constant 0 : index
      %c0_21 = arith.constant 0 : index
      %37 = vector.load %arg7[%c0_20, %c0_21] : memref<16x32xf32, #tpu.memory_space<vmem>>, vector<16x32xf32>
      tpu.vector_store %arg7[%c0_20, %c0_21], %36 {strides = array<i32>} : memref<16x32xf32, #tpu.memory_space<vmem>>, vector<16x32xf32>,
      %cst_22 = arith.constant 0.000000e+00 : f32
      %38 = vector.broadcast %cst_22 : f32 to vector<16x1xf32>
      %c0_23 = arith.constant 0 : index
      %c0_24 = arith.constant 0 : index
      %39 = vector.load %arg6[%c0_23, %c0_24] : memref<16x1xf32, #tpu.memory_space<vmem>>, vector<16x1xf32>
      tpu.vector_store %arg6[%c0_23, %c0_24], %38 {strides = array<i32>} : memref<16x1xf32, #tpu.memory_space<vmem>>, vector<16x1xf32>,
    } else {
    }
    %c0 = arith.constant 0 : index
    %c0_1 = arith.constant 0 : index
    %3 = vector.load %arg7[%c0, %c0_1] : memref<16x32xf32, #tpu.memory_space<vmem>>, vector<16x32xf32>
    %c0_2 = arith.constant 0 : index
    %c0_3 = arith.constant 0 : index
    %4 = vector.load %arg3[%c0_2, %c0_3] : memref<32x128xf32, #tpu.memory_space<vmem>>, vector<32x128xf32>
    %cst = arith.constant dense<0.000000e+00> : vector<16x128xf32>
    %5 = tpu.matmul %3, %4, %cst {dimension_numbers = #tpu.dot_dimension_numbers<[1], [0], [0], [1], [0, 0, 1, 1], [], []>} : vector<16x32xf32>, vector<32x128xf32>, vector<16x128xf32> -> vector<16x128xf32>
    %c0_4 = arith.constant 0 : index
    %c0_5 = arith.constant 0 : index
    %6 = vector.load %arg4[%c0_4, %c0_5] : memref<1x128xf32, #tpu.memory_space<vmem>>, vector<1x128xf32>
    %7 = vector.broadcast %6 : vector<1x128xf32> to vector<16x128xf32>
    %8 = arith.mulf %5, %7 : vector<16x128xf32>
    %c0_6 = arith.constant 0 : index
    %c0_7 = arith.constant 0 : index
    %9 = vector.load %arg5[%c0_6, %c0_7] : memref<16x128xf32, #tpu.memory_space<vmem>>, vector<16x128xf32>
    tpu.vector_store %arg5[%c0_6, %c0_7], %8 {strides = array<i32>} : memref<16x128xf32, #tpu.memory_space<vmem>>, vector<16x128xf32>,
    %cst_8 = arith.constant 1.000000e+01 : f32
    %10 = vector.broadcast %cst_8 : f32 to vector<16x128xf32>
    %11 = arith.mulf %10, %8 : vector<16x128xf32>
    %12 = math.exp %11 : vector<16x128xf32>
    %c128_i32 = arith.constant 128 : i32
    %13 = arith.muli %arg1, %c128_i32 : i32
    %14 = tpu.iota {dimensions = array<i32: 1>} : vector<16x128xi32>
    %15 = vector.broadcast %13 : i32 to vector<16x128xi32>
    %16 = arith.addi %15, %14 : vector<16x128xi32>
    %c300_i32 = arith.constant 300 : i32
    %17 = vector.broadcast %c300_i32 : i32 to vector<16x128xi32>
    %18 = arith.cmpi slt, %16, %17 : vector<16x128xi32>
    %cst_9 = arith.constant 0.000000e+00 : f32
    %19 = vector.broadcast %cst_9 : f32 to vector<16x128xf32>
    %20 = arith.select %18, %12, %19 : vector<16x128xi1>, vector<16x128xf32>
    %c0_10 = arith.constant 0 : index
    %c0_11 = arith.constant 0 : index
    %21 = vector.load %arg6[%c0_10, %c0_11] : memref<16x1xf32, #tpu.memory_space<vmem>>, vector<16x1xf32>
    %cst_12 = arith.constant dense<0.000000e+00> : vector<16xf32>
    %22 = vector.multi_reduction <add>, %20, %cst_12 [1] : vector<16x128xf32> to vector<16xf32>
    %23 = vector.shape_cast %22 : vector<16xf32> to vector<16x1xf32>
    %24 = arith.addf %21, %23 : vector<16x1xf32>
    %c0_13 = arith.constant 0 : index
    %c0_14 = arith.constant 0 : index
    %25 = vector.load %arg6[%c0_13, %c0_14] : memref<16x1xf32, #tpu.memory_space<vmem>>, vector<16x1xf32>
    tpu.vector_store %arg6[%c0_13, %c0_14], %24 {strides = array<i32>} : memref<16x1xf32, #tpu.memory_space<vmem>>, vector<16x1xf32>,
    return
  }
  func.func @transform_0(%arg0: i32, %arg1: i32) -> (i32, i32) {
    %c0_i32 = arith.constant 0 : i32
    %c0_i32_0 = arith.constant 0 : i32
    return %arg0, %c0_i32 : i32, i32
  }
  func.func @transform_1(%arg0: i32, %arg1: i32) -> (i32, i32) {
    %c0_i32 = arith.constant 0 : i32
    %c0_i32_0 = arith.constant 0 : i32
    return %c0_i32, %arg1 : i32, i32
  }
  func.func @transform_2(%arg0: i32, %arg1: i32) -> (i32, i32) {
    %c0_i32 = arith.constant 0 : i32
    %c0_i32_0 = arith.constant 0 : i32
    return %c0_i32, %arg1 : i32, i32
  }
  func.func @transform_3(%arg0: i32, %arg1: i32) -> (i32, i32) {
    %c0_i32 = arith.constant 0 : i32
    return %arg0, %arg1 : i32, i32
  }
  func.func @transform_4(%arg0: i32, %arg1: i32) -> (i32, i32) {
    %c0_i32 = arith.constant 0 : i32
    %c0_i32_0 = arith.constant 0 : i32
    return %arg0, %c0_i32 : i32, i32
  }
}

</mosaic_0001>

<llo_original>
// kernel: tpu_custom_call.1
$region0: #{tpu_custom_call.1}
  #allocation0 [shape = 'u32[]', space=smem, size = 0x4, offset = 0x4, fixed_abs, tag = 'smem constant byte address 0x4 - core index']
  #allocation1 [shape = 'u32[144,128]{1,0:T(1,128)}', space=vmem, size = 0x12000, scoped, tag = 'internal scratch']
  #allocation2 [shape = 'f32[16,32]{1,0:T(8,128)}', space=vmem, size = 0x2000, scoped, tag = 'scratch operand']
  %s0 = inlined_call_operand.hbm [shape: f32[16,32], index: 0, kind: input, shape index: {}]
  %s1 = inlined_call_operand.hbm [shape: f32[32,384], index: 1, kind: input, shape index: {}]
  %s2 = inlined_call_operand.vmem [shape: f32[1,384], index: 2, kind: input, shape index: {}]
  %s3 = inlined_call_operand.hbm [shape: f32[16,384], index: 3, kind: output, shape index: {0}]
  %s4 = inlined_call_operand.vmem [shape: f32[16,1], index: 4, kind: output, shape index: {1}]
  %5 = xla_tuple %s3, %s4
  %s6 = sld [smem:[#allocation0]]
  $region65: #{tpu_custom_call.1} parent=0
    _
  %s8 = ssub.s32 1, %s6
  %s9 = scalar_select 0, %s8, %s6
  $region1: #{tpu_custom_call.1} parent=0
    #allocation3 [shape = 'u8[8192]{0}', space=vmem, size = 0x2000, scoped, tag = 'input window, operand 0, single buffered']
    #allocation4 [shape = 's32[2]{0}', space=sflag, size = 0x8, scoped, tag = 'scoped memory for tpu_custom_call.1']
    #allocation5 [shape = 's32[2]{0}', space=sflag, size = 0x8, scoped, tag = 'scoped memory for tpu_custom_call.1']
    #allocation6 [shape = 'u8[32768]{0}', space=vmem, size = 0x8000, scoped, tag = 'input window, operand 1']
    #allocation7 [shape = 's32[2]{0}', space=sflag, size = 0x8, scoped, tag = 'scoped memory for tpu_custom_call.1']
    #allocation8 [shape = 'u8[16384]{0}', space=vmem, size = 0x4000, scoped, tag = 'output window, operand 0']
    %10 = vsyncpa [#allocation4], 0
    %11 = vsyncpa [#allocation7], 0
    %s12 = scalar_lea.sflag [#allocation7], 1
    %13 = vsyncpa %s12, 0
    %14 = vsyncpa [#allocation5], 0
    %s15 = scalar_lea.sflag [#allocation5], 1
    %16 = vsyncpa %s15, 0
    loop: start=0, step=1, limit=5
    $region2: #{tpu_custom_call.1} parent=1 // loop_pre_header
      _
    $region3: #{tpu_custom_call.1} parent=1 // loop_header
      %s18 = sphi 0, %s22
      %p19 = scmp.ge.s32.totalorder %s18, 5
      %s25 = sphi 0, %s37
      %s26 = sphi 0, %s33
      %s27 = sphi 0, %s25
      %s28 = sphi 0, %s26
      %s29 = sphi 0, %s27
      %s30 = sphi 0, %s28
      %s40 = sphi 0, %s42
      %s43 = sphi 0, %s40
      %s44 = sphi 0, %s43
      %s60 = sphi 0, %s44
      %s66 = sphi 0, %s68
      %s69 = sphi 0, %s66
      %s70 = sphi 0, %s69
      %s86 = sphi 0, %s70
      %s92 = sphi 0, %s94
      %s95 = sphi 0, %s92
      %s96 = sphi 0, %s95
      %s112 = sphi 0, %s96
      %s120 = sphi 0, %s122
      %s123 = sphi 0, %s120
      %s124 = sphi 0, %s123
      %s140 = sphi 0, %s124
      %s146 = sphi 0, %s148
      %s149 = sphi 0, %s146
      %s150 = sphi 0, %s149
      %s166 = sphi 0, %s150
    $region4: #{tpu_custom_call.1} parent=1 // loop_header_branch
      %21 = sbr.rel (%p19) target = $region8
    $region5: #{tpu_custom_call.1} parent=1 // loop_body
      %s23 = ssub.s32 %s18, 1
      %s24 = ssub.s32 %s18, 2
      %s31 = sadd.s32 1, %s26
      %p32 = scmp.ge.s32.totalorder %s31, 3
      %s33 = scalar_select %p32, 0, %s31
      %s34 = sadd.s32 1, %s25
      %s35 = scalar_select %p32, %s34, %s25
      %p36 = scmp.ge.s32.totalorder %s35, 1
      %s37 = scalar_select %p36, 0, %s35
      %s38 = ssub.s32 %s25, %s37
      %p39 = scmp.eq.s32.totalorder %s38, 0
      %s41 = sadd.s32 %s40, 1
      %s42 = scalar_select %p39, %s40, %s41
      %p45 = pneg %p39
      %p46 = scmp.eq.s32.totalorder %s18, 2
      %p47 = por %p45, %p46
      %p48 = scmp.ne.s32.totalorder %s40, %s43
      %p49 = scmp.eq.s32.totalorder %s18, 0
      %p50 = por %p48, %p49
      %p51 = scmp.ne.s32.totalorder %s40, %s43
      %p52 = scmp.eq.s32.totalorder %s23, 2
      %p53 = por %p51, %p52
      %p54 = scmp.ne.s32.totalorder %s43, %s44
      %p55 = scmp.eq.s32.totalorder %s23, 0
      %p56 = por %p54, %p55
      %p57 = scmp.ne.s32.totalorder %s43, %s44
      %p58 = scmp.eq.s32.totalorder %s24, 2
      %p59 = por %p57, %p58
      %p61 = scmp.ne.s32.totalorder %s44, %s60
      %p62 = scmp.eq.s32.totalorder %s24, 0
      %p63 = por %p61, %p62
      %s64 = ssub.s32 %s26, %s33
      %p65 = scmp.eq.s32.totalorder %s64, 0
      %s67 = sadd.s32 %s66, 1
      %s68 = scalar_select %p65, %s66, %s67
      %p71 = pneg %p65
      %p72 = scmp.eq.s32.totalorder %s18, 2
      %p73 = por %p71, %p72
      %p74 = scmp.ne.s32.totalorder %s66, %s69
      %p75 = scmp.eq.s32.totalorder %s18, 0
      %p76 = por %p74, %p75
      %p77 = scmp.ne.s32.totalorder %s66, %s69
      %p78 = scmp.eq.s32.totalorder %s23, 2
      %p79 = por %p77, %p78
      %p80 = scmp.ne.s32.totalorder %s69, %s70
      %p81 = scmp.eq.s32.totalorder %s23, 0
      %p82 = por %p80, %p81
      %p83 = scmp.ne.s32.totalorder %s69, %s70
      %p84 = scmp.eq.s32.totalorder %s24, 2
      %p85 = por %p83, %p84
      %p87 = scmp.ne.s32.totalorder %s70, %s86
      %p88 = scmp.eq.s32.totalorder %s24, 0
      %p89 = por %p87, %p88
      %s90 = ssub.s32 %s26, %s33
      %p91 = scmp.eq.s32.totalorder %s90, 0
      %s93 = sadd.s32 %s92, 1
      %s94 = scalar_select %p91, %s92, %s93
      %p97 = pneg %p91
      %p98 = scmp.eq.s32.totalorder %s18, 2
      %p99 = por %p97, %p98
      %p100 = scmp.ne.s32.totalorder %s92, %s95
      %p101 = scmp.eq.s32.totalorder %s18, 0
      %p102 = por %p100, %p101
      %p103 = scmp.ne.s32.totalorder %s92, %s95
      %p104 = scmp.eq.s32.totalorder %s23, 2
      %p105 = por %p103, %p104
      %p106 = scmp.ne.s32.totalorder %s95, %s96
      %p107 = scmp.eq.s32.totalorder %s23, 0
      %p108 = por %p106, %p107
      %p109 = scmp.ne.s32.totalorder %s95, %s96
      %p110 = scmp.eq.s32.totalorder %s24, 2
      %p111 = por %p109, %p110
      %p113 = scmp.ne.s32.totalorder %s96, %s112
      %p114 = scmp.eq.s32.totalorder %s24, 0
      %p115 = por %p113, %p114
      %s116 = ssub.s32 %s25, %s37
      %s117 = ssub.s32 %s26, %s33
      %s118 = sor.u32 %s116, %s117
      %p119 = scmp.eq.s32.totalorder %s118, 0
      %s121 = sadd.s32 %s120, 1
      %s122 = scalar_select %p119, %s120, %s121
      %p125 = pneg %p119
      %p126 = scmp.eq.s32.totalorder %s18, 2
      %p127 = por %p125, %p126
      %p128 = scmp.ne.s32.totalorder %s120, %s123
      %p129 = scmp.eq.s32.totalorder %s18, 0
      %p130 = por %p128, %p129
      %p131 = scmp.ne.s32.totalorder %s120, %s123
      %p132 = scmp.eq.s32.totalorder %s23, 2
      %p133 = por %p131, %p132
      %p134 = scmp.ne.s32.totalorder %s123, %s124
      %p135 = scmp.eq.s32.totalorder %s23, 0
      %p136 = por %p134, %p135
      %p137 = scmp.ne.s32.totalorder %s123, %s124
      %p138 = scmp.eq.s32.totalorder %s24, 2
      %p139 = por %p137, %p138
      %p141 = scmp.ne.s32.totalorder %s124, %s140
      %p142 = scmp.eq.s32.totalorder %s24, 0
      %p143 = por %p141, %p142
      %s144 = ssub.s32 %s25, %s37
      %p145 = scmp.eq.s32.totalorder %s144, 0
      %s147 = sadd.s32 %s146, 1
      %s148 = scalar_select %p145, %s146, %s147
      %p151 = pneg %p145
      %p152 = scmp.eq.s32.totalorder %s18, 2
      %p153 = por %p151, %p152
      %p154 = scmp.ne.s32.totalorder %s146, %s149
      %p155 = scmp.eq.s32.totalorder %s18, 0
      %p156 = por %p154, %p155
      %p157 = scmp.ne.s32.totalorder %s146, %s149
      %p158 = scmp.eq.s32.totalorder %s23, 2
      %p159 = por %p157, %p158
      %p160 = scmp.ne.s32.totalorder %s149, %s150
      %p161 = scmp.eq.s32.totalorder %s23, 0
      %p162 = por %p160, %p161
      %p163 = scmp.ne.s32.totalorder %s149, %s150
      %p164 = scmp.eq.s32.totalorder %s24, 2
      %p165 = por %p163, %p164
      %p167 = scmp.ne.s32.totalorder %s150, %s166
      %p168 = scmp.eq.s32.totalorder %s24, 0
      %p169 = por %p167, %p168
      %p170 = scmp.le.s32.totalorder 1, %s18
      %p171 = scmp.lt.s32.totalorder %s18, 4
      %p172 = pnand %p170, %p171
      %p173 = pneg %p172
      // Predicated region
      $region9: #{tpu_custom_call.1} parent=5 // pred_check
        _
      $region10: #{tpu_custom_call.1} parent=5 // pred_check_branch
        %175 = sbr.rel (%p172) target = $region12
      $region11: #{tpu_custom_call.1} parent=5 // pred_region
        %s176 = ssub.s32 %s18, 1
        // Predicated region
        $region13: #{tpu_custom_call.1} parent=11 // pred_check
          %p177 = pneg %p56
        $region14: #{tpu_custom_call.1} parent=11 // pred_check_branch
          %179 = sbr.rel (%p177) target = $region16
        $region15: #{tpu_custom_call.1} parent=11 // pred_region
          %s180 = smul.u32 2, %s27
          %s182 = ssub.s32 256, 256
          %183 = vsyncadd [#allocation4], %s182
          %s184 = smul.addr %s180, 128
          %s185 = scalar_lea.hbm %s0, %s184
          %s186 = sshll.u32 [#allocation3], 4
          %s187 = int_to_ptr.vmem [resolvable:$true] %s186
          %192 = dma.hbm_to_vmem [thread:$0]  %s185, 256, %s187, [#allocation4], 128, 128, 8
        $region16: #{tpu_custom_call.1} parent=11 // pred_fallthru
          _
      $region12: #{tpu_custom_call.1} parent=5 // pred_fallthru
        _
      %p193 = scmp.lt.s32.totalorder %s18, 3
      // Predicated region
      $region17: #{tpu_custom_call.1} parent=5 // pred_check
        %p194 = pneg %p193
      $region18: #{tpu_custom_call.1} parent=5 // pred_check_branch
        %196 = sbr.rel (%p194) target = $region20
      $region19: #{tpu_custom_call.1} parent=5 // pred_region
        // Predicated region
        $region21: #{tpu_custom_call.1} parent=19 // pred_check
          %p197 = pneg %p76
        $region22: #{tpu_custom_call.1} parent=19 // pred_check_branch
          %199 = sbr.rel (%p197) target = $region24
        $region23: #{tpu_custom_call.1} parent=19 // pred_region
          %s200 = sand.u32 %s66, 1
          %s201 = scalar_lea.sflag [#allocation7], %s200
          %s202 = sand.u32 %s66, 1
          %s203 = smul.addr %s202, 32
          %s204 = scalar_lea.vmem [#allocation6], %s203
          %s206 = ssub.s32 512, 512
          %207 = vsyncadd %s201, %s206
          %s208 = smul.addr %s26, 128
          %s209 = scalar_lea.hbm %s1, %s208
          %s210 = sshll.u32 %s204, 4
          %s211 = int_to_ptr.vmem [resolvable:$true] %s210
          %216 = dma.hbm_to_vmem [thread:$0]  %s209, 512, %s211, %s201, 384, 128, 8
        $region24: #{tpu_custom_call.1} parent=19 // pred_fallthru
          _
        // Predicated region
        $region25: #{tpu_custom_call.1} parent=19 // pred_check
          %p217 = pneg %p102
        $region26: #{tpu_custom_call.1} parent=19 // pred_check_branch
          %219 = sbr.rel (%p217) target = $region28
        $region27: #{tpu_custom_call.1} parent=19 // pred_region
          %p220 = scmp.lt.s32.totalorder %s26, 2
          %s221 = scalar_select %p220, %s26, 2
          %s222 = scalar_lea.vmem %s2, %s221
        $region28: #{tpu_custom_call.1} parent=19 // pred_fallthru
          _
      $region20: #{tpu_custom_call.1} parent=5 // pred_fallthru
        _
      %p223 = scmp.le.s32.totalorder 1, %s18
      %p224 = scmp.lt.s32.totalorder %s18, 4
      %p225 = pnand %p223, %p224
      %p226 = pneg %p225
      // Predicated region
      $region29: #{tpu_custom_call.1} parent=5 // pred_check
        _
      $region30: #{tpu_custom_call.1} parent=5 // pred_check_branch
        %228 = sbr.rel (%p225) target = $region32
      $region31: #{tpu_custom_call.1} parent=5 // pred_region
        %s229 = ssub.s32 %s18, 1
        // Predicated region
        $region33: #{tpu_custom_call.1} parent=31 // pred_check
          %p230 = pneg %p56
        $region34: #{tpu_custom_call.1} parent=31 // pred_check_branch
          %232 = sbr.rel (%p230) target = $region36
        $region35: #{tpu_custom_call.1} parent=31 // pred_region
          %233 = dma.done [#allocation4], 256
        $region36: #{tpu_custom_call.1} parent=31 // pred_fallthru
          _
        %s234 = sand.u32 %s69, 1
        %s235 = scalar_lea.sflag [#allocation7], %s234
        %s236 = sand.u32 %s69, 1
        %s237 = smul.addr %s236, 32
        %s238 = scalar_lea.vmem [#allocation6], %s237
        // Predicated region
        $region37: #{tpu_custom_call.1} parent=31 // pred_check
          %p239 = pneg %p82
        $region38: #{tpu_custom_call.1} parent=31 // pred_check_branch
          %241 = sbr.rel (%p239) target = $region40
        $region39: #{tpu_custom_call.1} parent=31 // pred_region
          %242 = dma.done %s235, 512
        $region40: #{tpu_custom_call.1} parent=31 // pred_fallthru
          _
        %p243 = pneg %p56
        %p244 = pneg %p53
        %s245 = sand.u32 %s69, 1
        %s246 = scalar_lea.sflag [#allocation7], %s245
        %s247 = sand.u32 %s69, 1
        %s248 = smul.addr %s247, 32
        %s249 = scalar_lea.vmem [#allocation6], %s248
        %p250 = pneg %p82
        %p251 = pneg %p79
        %p252 = scmp.lt.s32.totalorder %s28, 2
        %s253 = scalar_select %p252, %s28, 2
        %s254 = scalar_lea.vmem %s2, %s253
        %p255 = pneg %p108
        %p256 = pneg %p105
        %p257 = pneg %p136
        %p258 = pneg %p133
        %s259 = sand.u32 %s123, 1
        %s260 = scalar_lea.sflag [#allocation5], %s259
        %s261 = sand.u32 %s123, 1
        %s262 = smul.addr %s261, 16
        %s263 = scalar_lea.vmem [#allocation8], %s262
        %p264 = pneg %p162
        %p265 = pneg %p159
        %s266 = smul.u32 2, %s27
        %p267 = scmp.lt.s32.totalorder %s266, 1
        %s268 = scalar_select %p267, %s266, 1
        %s269 = smul.addr %s268, 8
        %s270 = scalar_lea.vmem %s4, %s269
        %s271 = smul.u32 2, %s27
        %p272 = scmp.lt.s32.totalorder %s28, 2
        %s273 = scalar_select %p272, %s28, 2
        %s274 = scalar_lea.vmem %s2, %s273
        %s275 = smul.u32 2, %s27
        %s276 = smul.u32 2, %s27
        %p277 = scmp.lt.s32.totalorder %s276, 1
        %s278 = scalar_select %p277, %s276, 1
        %s279 = smul.addr %s278, 8
        %s280 = scalar_lea.vmem %s4, %s279
        %s281 = smul.u32 2, %s27
        %p282 = scmp.eq.s32.totalorder %s28, 0
        // Predicated region
        $region41: #{tpu_custom_call.1} parent=31 // pred_check
          %p283 = pneg %p282
        $region42: #{tpu_custom_call.1} parent=31 // pred_check_branch
          %285 = sbr.rel (%p283) target = $region44
        $region43: #{tpu_custom_call.1} parent=31 // pred_region
          %v286 = vld [vmem:[#allocation3] sm:$0xff]
          %v287 = vld [vmem:[#allocation3 + $0x8] sm:$0xff]
          %v288 = vmul.f32 %v286, %v286
          %v289 = vmul.f32 %v287, %v287
          %vm290 = vcmask 261120
          %v291 = vsel %vm290, %v288, 0.0
          %292 = vadd.xlane.f32.xlu0 %v291
          %v293 = vpop.xlane.xlu0 %292
          %v294 = vsel %vm290, %v289, 0.0
          %295 = vadd.xlane.f32.xlu0 %v294
          %v296 = vpop.xlane.xlu0 %295
          %v297 = vmax.f32 %v293, 1e-24
          %v298 = vmax.f32 %v296, 1e-24
          %v299 = vrsqrt.pop %v297
          %v300 = vrsqrt.pop %v298
          %v301 = vmul.f32 %v299, 0.1
          %v302 = vmul.f32 %v300, 0.1
          %v303 = vmul.f32 %v286, %v301
          %v304 = vmul.f32 %v287, %v302
          %305 = vst.msk [vmem:[#allocation2] sm:$0xff] %vm290, %v303
          %306 = vst.msk [vmem:[#allocation2 + $0x8] sm:$0xff] %vm290, %v304
          %vm307 = vcmask 7168
          %308 = vst.msk [vmem:[%s280] sm:$0xff] %vm307, 0.0
          %309 = vst.msk [vmem:[%s280 + $0x8] sm:$0xff] %vm307, 0.0
        $region44: #{tpu_custom_call.1} parent=31 // pred_fallthru
          _
        %v310 = vld [vmem:[#allocation2] sm:$0xff]
        %v311 = vld [vmem:[#allocation2 + $0x8] sm:$0xff]
        %v312 = vld [vmem:[%s238] sm:$0xff]
        %v313 = vld [vmem:[%s238 + $0x8] sm:$0xff]
        %v314 = vld [vmem:[%s238 + $0x10] sm:$0xff]
        %v315 = vld [vmem:[%s238 + $0x18] sm:$0xff]
        %vm316 = vcmask 261120
        %v318 = vsel %vm316, %v310, 0
        %v321 = vsel %vm316, %v311, 0
        %323 = vmatprep.subr.mxu0 0.0
        %324 = vmatpush1.msra.mxu0 %v312
        %325 = vmatprep.subr.mxu0 0.0
        %326 = vmatpush1.msra.mxu0 %v313
        %327 = vmatprep.subr.mxu0 0.0
        %328 = vmatpush1.msra.mxu0 %v314
        %329 = vmatprep.subr.mxu0 0.0
        %330 = vmatpush1.msra.mxu0 %v315
        %331 = vmatprep.subr.mxu0 0.0
        %332 = vmatpush1.msra.mxu0 0.0
        %333 = vmatprep.subr.mxu0 0.0
        %334 = vmatpush1.msra.mxu0 0.0
        %335 = vmatprep.subr.mxu0 0.0
        %336 = vmatpush1.msra.mxu0 0.0
        %337 = vmatprep.subr.mxu0 0.0
        %338 = vmatpush1.msra.mxu0 0.0
        %339 = vmatprep.subr.mxu0 0.0
        %340 = vmatpush1.msra.mxu0 0.0
        %341 = vmatprep.subr.mxu0 0.0
        %342 = vmatpush1.msra.mxu0 0.0
        %343 = vmatprep.subr.mxu0 0.0
        %344 = vmatpush1.msra.mxu0 0.0
        %345 = vmatprep.subr.mxu0 0.0
        %346 = vmatpush1.msra.mxu0 0.0
        %347 = vmatprep.subr.mxu0 0.0
        %348 = vmatpush1.msra.mxu0 0.0
        %349 = vmatprep.subr.mxu0 0.0
        %350 = vmatpush1.msra.mxu0 0.0
        %351 = vmatprep.subr.mxu0 0.0
        %352 = vmatpush1.msra.mxu0 0.0
        %353 = vmatprep.subr.mxu0 0.0
        %354 = vmatpush1.msra.mxu0 0.0
        %355 = vmatprep.subr.mxu0 0.0
        %356 = vmatpush1.msra.mxu0 0.0
        %357 = vmatprep.subr.mxu0 0.0
        %358 = vmatpush1.msra.mxu0 0.0
        %359 = vmatprep.subr.mxu0 0.0
        %360 = vmatpush1.msra.mxu0 0.0
        %361 = vmatprep.subr.mxu0 0.0
        %362 = vmatpush1.msra.mxu0 0.0
        %363 = vmatprep.subr.mxu0 0.0
        %364 = vmatpush1.msra.mxu0 0.0
        %365 = vmatprep.subr.mxu0 0.0
        %366 = vmatpush1.msra.mxu0 0.0
        %367 = vmatprep.subr.mxu0 0.0
        %368 = vmatpush1.msra.mxu0 0.0
        %369 = vmatprep.subr.mxu0 0.0
        %370 = vmatpush1.msra.mxu0 0.0
        %371 = vmatprep.subr.mxu0 0.0
        %372 = vmatpush1.msra.mxu0 0.0
        %373 = vmatprep.subr.mxu0 0.0
        %374 = vmatpush1.msra.mxu0 0.0
        %375 = vmatprep.subr.mxu0 0.0
        %376 = vmatpush1.msra.mxu0 0.0
        %377 = vmatprep.subr.mxu0 0.0
        %378 = vmatpush1.msra.mxu0 0.0
        %379 = vmatprep.subr.mxu0 0.0
        %380 = vmatpush1.msra.mxu0 0.0
        %381 = vmatprep.subr.mxu0 0.0
        %382 = vmatpush1.msra.mxu0 0.0
        %383 = vmatprep.subr.mxu0 0.0
        %384 = vmatpush1.msra.mxu0 0.0
        %385 = vmatprep.subr.mxu0 0.0
        %386 = vmatpush1.msra.mxu0 0.0
        %387 = vmatprep.mubr.f32.mxu0 0.0
        %388 = vmatmul.mubr.f32.gmra.mrb[0].mxu0 %v318
        %v389 = vpop.f32.mrb[0].mxu0
        %v390 = vadd.f32 0.0, %v389
        %v391 = vpop.f32.mrb[0].mxu0
        %392 = vmatprep.mubr.f32.mxu0 0.0
        %393 = vmatmul.mubr.f32.gmra.mrb[0].mxu0 %v321
        %v394 = vpop.f32.mrb[0].mxu0
        %v395 = vadd.f32 0.0, %v394
        %v396 = vpop.f32.mrb[0].mxu0
        %397 = vdwg.mxu0
        %v398 = vld [vmem:[%s274] sm:$0x1]
        %v400 = vlaneseq
        %v401 = vshrl.u32 %v400, 7
        %v402 = vsub.s32 0, %v401
        %v403 = vrot.slane %v398, %v402
        %v405 = vmul.f32 %v390, %v403
        %v406 = vmul.f32 %v395, %v403
        %407 = vst [vmem:[%s263] sm:$0xff] %v405
        %408 = vst [vmem:[%s263 + $0x8] sm:$0xff] %v406
        %v409 = vmul.f32 %v405, 10.0
        %v410 = vmul.f32 %v406, 10.0
        %v411 = vmul.f32 %v409, 1.442695
        %v412 = vpow.pop %v411
        %v413 = vmul.f32 %v410, 1.442695
        %v414 = vpow.pop %v413
        %s415 = smul.u32 %s28, 128
        %v416 = vlaneseq
        %v417 = vand.u32 %v416, 127
        %v418 = vstv %s415
        %v419 = vadd.s32 %v418, %v417
        %vm420 = vcmp.lt.s32.totalorder %v419, 300
        %v421 = vsel %vm420, %v412, 0.0
        %v422 = vsel %vm420, %v414, 0.0
        %v423 = vld [vmem:[%s280] sm:$0xff]
        %v424 = vld [vmem:[%s280 + $0x8] sm:$0xff]
        %425 = vadd.xlane.f32.xlu0 %v421
        %v426 = vpop.xlane.xlu0 %425
        %427 = vadd.xlane.f32.xlu0 %v422
        %v428 = vpop.xlane.xlu0 %427
        %v429 = vadd.f32 %v423, %v426
        %v430 = vadd.f32 %v424, %v428
        %vm431 = vcmask 7168
        %432 = vst.msk [vmem:[%s280] sm:$0xff] %vm431, %v429
        %433 = vst.msk [vmem:[%s280 + $0x8] sm:$0xff] %vm431, %v430
        %s434 = sand.u32 %s123, 1
        %s435 = scalar_lea.sflag [#allocation5], %s434
        %s436 = sand.u32 %s123, 1
        %s437 = smul.addr %s436, 16
        %s438 = scalar_lea.vmem [#allocation8], %s437
        %s439 = smul.u32 2, %s27
        %p440 = scmp.lt.s32.totalorder %s439, 1
        %s441 = scalar_select %p440, %s439, 1
        %s442 = smul.addr %s441, 8
        %s443 = scalar_lea.vmem %s4, %s442
        // Predicated region
        $region45: #{tpu_custom_call.1} parent=31 // pred_check
          %p444 = pneg %p133
        $region46: #{tpu_custom_call.1} parent=31 // pred_check_branch
          %446 = sbr.rel (%p444) target = $region48
        $region47: #{tpu_custom_call.1} parent=31 // pred_region
          %s447 = smul.u32 2, %s27
          %s449 = ssub.s32 256, 256
          %450 = vsyncadd %s435, %s449
          %s451 = smul.addr %s447, 3
          %s452 = sadd.s32 %s28, %s451
          %s453 = smul.addr %s452, 128
          %s454 = scalar_lea.hbm %s3, %s453
          %s455 = sshll.u32 %s438, 4
          %s456 = int_to_ptr.vmem [resolvable:$true] %s455
          %461 = dma.vmem_to_hbm [thread:$0]  %s456, 256, %s454, %s435, 128, 384, 8
        $region48: #{tpu_custom_call.1} parent=31 // pred_fallthru
          _
        // Predicated region
        $region49: #{tpu_custom_call.1} parent=31 // pred_check
          %p462 = pneg %p159
        $region50: #{tpu_custom_call.1} parent=31 // pred_check_branch
          %464 = sbr.rel (%p462) target = $region52
        $region51: #{tpu_custom_call.1} parent=31 // pred_region
          %s465 = smul.u32 2, %s27
        $region52: #{tpu_custom_call.1} parent=31 // pred_fallthru
          _
        // Predicated region
        $region53: #{tpu_custom_call.1} parent=31 // pred_check
          %p466 = pneg %p159
        $region54: #{tpu_custom_call.1} parent=31 // pred_check_branch
          %468 = sbr.rel (%p466) target = $region56
        $region55: #{tpu_custom_call.1} parent=31 // pred_region
          %s469 = smul.u32 2, %s27
          %p470 = scmp.lt.s32.totalorder %s469, 1
          %s471 = scalar_select %p470, %s469, 1
          %s472 = smul.addr %s471, 8
          %s473 = scalar_lea.vmem %s4, %s472
        $region56: #{tpu_custom_call.1} parent=31 // pred_fallthru
          _
      $region32: #{tpu_custom_call.1} parent=5 // pred_fallthru
        _
      %p474 = scmp.le.s32.totalorder 2, %s18
      // Predicated region
      $region57: #{tpu_custom_call.1} parent=5 // pred_check
        %p475 = pneg %p474
      $region58: #{tpu_custom_call.1} parent=5 // pred_check_branch
        %477 = sbr.rel (%p475) target = $region60
      $region59: #{tpu_custom_call.1} parent=5 // pred_region
        %s478 = ssub.s32 %s18, 2
        // Predicated region
        $region61: #{tpu_custom_call.1} parent=59 // pred_check
          %p479 = pneg %p139
        $region62: #{tpu_custom_call.1} parent=59 // pred_check_branch
          %481 = sbr.rel (%p479) target = $region64
        $region63: #{tpu_custom_call.1} parent=59 // pred_region
          %s482 = sand.u32 %s124, 1
          %s483 = scalar_lea.sflag [#allocation5], %s482
          %s484 = sand.u32 %s124, 1
          %s485 = smul.addr %s484, 16
          %s486 = scalar_lea.vmem [#allocation8], %s485
          %487 = dma.done %s483, 256
        $region64: #{tpu_custom_call.1} parent=59 // pred_fallthru
          _
      $region60: #{tpu_custom_call.1} parent=5 // pred_fallthru
        _
    $region6: #{tpu_custom_call.1} parent=1 // loop_footer
      %s22 = sadd.s32 1, %s18
    $region7: #{tpu_custom_call.1} parent=1 // loop_footer_branch
      %17 = sbr.rel target = $region3
    $region8: #{tpu_custom_call.1} parent=1 // loop_exit
      _
    %488 = vsyncpa [#allocation4], 1
    %s489 = scalar_lea.sflag [#allocation4], 1
    %490 = vsyncpa %s489, 1
    %491 = vsyncpa [#allocation7], 1
    %s492 = scalar_lea.sflag [#allocation7], 1
    %493 = vsyncpa %s492, 1
    %494 = vsyncpa [#allocation5], 1
    %s495 = scalar_lea.sflag [#allocation5], 1
    %496 = vsyncpa %s495, 1

</llo_original>
